<compile_context>
chip_gen: v5e
topology: v5e:2x2
jax: 0.10.0
libtpu: 0.0.40
codegen_flags: <defaults>
</compile_context>

<pallas_src>
import jax
import jax.numpy as jnp
from jax.experimental import pallas as pl
from jax.experimental.pallas import tpu as pltpu


def _round_up(x, m):
    return ((x + m - 1) // m) * m


def _make_trace_kernel(b_tile, true_b, needs_mask):
    """Per-tile partial of sum_b tr(Sigma_pre^{-1} Sigma_post)."""

    def _kernel(sinv_ref, post_ref, out_ref):
        s = sinv_ref[...].astype(jnp.float32)                # (b_tile, D*D)
        q = post_ref[...].astype(jnp.float32)
        row_sum = jnp.sum(s * q, axis=-1, keepdims=True)     # (b_tile, 1)
        if needs_mask:
            # Ragged last tile: rows with global batch index >= true_b hold
            # out-of-bounds garbage; select them out (no wrapper padding copy).
            rows = jax.lax.broadcasted_iota(jnp.int32, (b_tile, 1), 0)
            rows = rows + pl.program_id(0) * b_tile
            row_sum = jnp.where(rows < true_b, row_sum, 0.0)
        tile_sum = jnp.sum(row_sum, axis=0, keepdims=True)   # (1, 1)
        # Lane-dense, (8,128)-aligned output block; wrapper reads [:, 0, 0].
        out_ref[...] = jnp.broadcast_to(tile_sum[None], (1, 8, 128))

    return _kernel


def _pick_b_tile(b, dd, itemsize, vmem_limit_bytes):
    """Largest batch tile whose PADDED VMEM footprint fits the scoped limit."""
    dd_pad = _round_up(dd, 128)            # lane padding of the trailing dim
    sub = 16 if itemsize == 2 else 8       # sublane packing granularity
    # 2 inputs x 2 pipeline buffers at `itemsize` + one f32 product
    # intermediate, all at lane-padded width; ~70% of the scoped limit leaves
    # headroom for the output block, semaphores and compiler scratch.
    per_row = dd_pad * (2 * 2 * itemsize + 4)
    budget = int(0.7 * vmem_limit_bytes)
    bt = budget // per_row
    if bt >= b:
        return b
    bt = max(sub, (bt // sub) * sub)       # keep sublane-aligned blocks
    return min(bt, b)


def fr_multivariate_normal_kl(pre_mean, pre_std, post_mean, post_std,
                              b_tile=None, kernel_dtype=jnp.float32,
                              vmem_limit_bytes=32 * 1024 * 1024):
    """Forward pass of FRMultivariateNormal: mean_b KL(posterior || prior).

    pre_mean/post_mean: (B, D) f32; pre_std/post_std: (B, D, D) SPD covariance
    matrices (torch.MultivariateNormal's 2nd positional arg).

    vmem_limit_bytes: 32 MiB is safe on all gens (v7x: 64 MiB physical VMEM);
    on v5e/v6e (128 MiB VMEM) raise to 64-96 MiB so b_tile grows and per-step
    overhead amortizes better.
    """
    b, d = pre_mean.shape
    dd = d * d
    f32 = jnp.float32
    pre_cov = pre_std.astype(f32)
    post_cov = post_std.astype(f32)

    # TODO(synk): batched Cholesky + triangular solve are sequential
    # factorizations with no clean Pallas equivalent; they stay in XLA glue.
    l_pre = jnp.linalg.cholesky(pre_cov)
    l_post = jnp.linalg.cholesky(post_cov)
    eye_b = jnp.broadcast_to(jnp.eye(d, dtype=f32), (b, d, d))
    a_pre = jax.scipy.linalg.solve_triangular(l_pre, eye_b, lower=True)  # L_pre^{-1}
    sigma_pre_inv = jnp.einsum("bki,bkj->bij", a_pre, a_pre)             # A^T A

    # Tiny per-batch terms kept in f32 XLA (numerically sensitive logs, O(B*D)).
    half_term1 = (jnp.sum(jnp.log(jnp.diagonal(l_pre, axis1=-2, axis2=-1)), -1)
                  - jnp.sum(jnp.log(jnp.diagonal(l_post, axis1=-2, axis2=-1)), -1))
    delta = (pre_mean - post_mean).astype(f32)
    y = jnp.einsum("bij,bj->bi", a_pre, delta)
    term3 = jnp.sum(y * y, axis=-1)                                      # (B,)

    # Lane-dense flattened views for the heavy trace term (reshapes are free).
    # bf16 kernel inputs halve kernel-side HBM reads; they only pay off when the
    # producers can emit bf16 directly, so the default stays f32.
    sinv_flat = sigma_pre_inv.reshape(b, dd).astype(kernel_dtype)
    post_flat = post_cov.reshape(b, dd).astype(kernel_dtype)

    itemsize = jnp.dtype(kernel_dtype).itemsize
    sub = 16 if itemsize == 2 else 8
    if b_tile is None:
        b_tile = _pick_b_tile(b, dd, itemsize, vmem_limit_bytes)
    else:
        b_tile = b if b_tile >= b else min(b, max(sub, (b_tile // sub) * sub))
    n_tiles = pl.cdiv(b, b_tile)
    needs_mask = (b % b_tile) != 0

    kernel = _make_trace_kernel(b_tile, b, needs_mask)

    partials = pl.pallas_call(
        kernel,
        out_shape=jax.ShapeDtypeStruct((n_tiles, 8, 128), jnp.float32),
        grid=(n_tiles,),
        in_specs=[
            pl.BlockSpec((b_tile, dd), lambda i: (i, 0)),
            pl.BlockSpec((b_tile, dd), lambda i: (i, 0)),
        ],
        out_specs=pl.BlockSpec((1, 8, 128), lambda i: (i, 0, 0)),
        compiler_params=pltpu.CompilerParams(
            dimension_semantics=("parallel",),
            vmem_limit_bytes=vmem_limit_bytes,
        ),
        cost_estimate=pl.CostEstimate(
            flops=2 * b * dd,
            transcendentals=0,
            bytes_accessed=2 * b * dd * itemsize + n_tiles * 8 * 128 * 4,
        ),
    )(sinv_flat, post_flat)

    term2_total = jnp.sum(partials[:, 0, 0])      # sum_b tr(Sigma_pre^{-1} Sigma_post)
    kl_mean = jnp.mean(half_term1 + 0.5 * (term3 - d)) + 0.5 * term2_total / b
    return kl_mean


def _reference_kl(pre_mean, pre_cov, post_mean, post_cov):
    """Pure-JAX reference, same math as torch.distributions.kl_divergence."""
    b, d = pre_mean.shape
    l0 = jnp.linalg.cholesky(pre_cov)
    l1 = jnp.linalg.cholesky(post_cov)
    a = jax.scipy.linalg.solve_triangular(
        l0, jnp.broadcast_to(jnp.eye(d, dtype=pre_cov.dtype), (b, d, d)), lower=True
    )
    half_term1 = (jnp.sum(jnp.log(jnp.diagonal(l0, axis1=-2, axis2=-1)), -1)
                  - jnp.sum(jnp.log(jnp.diagonal(l1, axis1=-2, axis2=-1)), -1))
    m = jnp.einsum("bij,bjk->bik", a, l1)
    term2 = jnp.sum(m * m, axis=(-2, -1))
    delta = pre_mean - post_mean
    y = jnp.einsum("bij,bj->bi", a, delta)
    term3 = jnp.sum(y * y, -1)
    return jnp.mean(half_term1 + 0.5 * (term2 + term3 - d))


if __name__ == "__main__":
    def make_inputs(b, d, key):
        k1, k2, k3, k4 = jax.random.split(key, 4)
        pre_mean = jax.random.normal(k1, (b, d), jnp.float32)
        post_mean = jax.random.normal(k2, (b, d), jnp.float32)

        def make_spd(k):
            x = jax.random.normal(k, (b, d, d), jnp.float32)
            return (jnp.einsum("bij,bkj->bik", x, x) / d
                    + 0.5 * jnp.eye(d, dtype=jnp.float32))

        return pre_mean, make_spd(k3), post_mean, make_spd(k4)

    # Case 1: small batch, single tile, f32.
    B, D = 4, 32
    pm, pc, qm, qc = make_inputs(B, D, jax.random.PRNGKey(0))
    kl = jax.block_until_ready(fr_multivariate_normal_kl(pm, pc, qm, qc))
    expected = _reference_kl(pm, pc, qm, qc)
    assert jnp.allclose(kl, expected, rtol=1e-3, atol=1e-3), (kl, expected)

    # Case 2: multi-tile "parallel" grid with a ragged last tile (B=20,
    # b_tile=8 -> 3 tiles; rows 20..23 masked in-kernel, no padding copy).
    B2 = 20
    pm2, pc2, qm2, qc2 = make_inputs(B2, D, jax.random.PRNGKey(1))
    kl2 = jax.block_until_ready(
        fr_multivariate_normal_kl(pm2, pc2, qm2, qc2, b_tile=8))
    expected2 = _reference_kl(pm2, pc2, qm2, qc2)
    assert jnp.allclose(kl2, expected2, rtol=1e-3, atol=1e-3), (kl2, expected2)

    # Case 3: bf16 kernel inputs (halved kernel-side HBM reads), loose tolerance.
    kl3 = jax.block_until_ready(
        fr_multivariate_normal_kl(pm, pc, qm, qc, kernel_dtype=jnp.bfloat16))
    assert jnp.allclose(kl3, expected, rtol=5e-2, atol=5e-2), (kl3, expected)

    print("KERNEL_OK")
</pallas_src>

<mosaic_0001>
module attributes {stable_mosaic.version = 11 : i64} {
  func.func @_kernel(%arg0: i32, %arg1: memref<4x1024xf32, #tpu.memory_space<vmem>>, %arg2: memref<4x1024xf32, #tpu.memory_space<vmem>>, %arg3: memref<1x8x128xf32, #tpu.memory_space<vmem>>) attributes {dimension_semantics = [#tpu.dimension_semantics<parallel>], iteration_bounds = array<i64: 1>, scalar_prefetch = 0 : i64, scratch_operands = 0 : i64, tpu.core_type = #tpu.core_type<tc>, window_params = [{transform_indices = @transform_0, window_bounds = array<i64: 4, 1024>}, {transform_indices = @transform_1, window_bounds = array<i64: 4, 1024>}, {transform_indices = @transform_2, window_bounds = array<i64: 1, 8, 128>}]} {
    %c0 = arith.constant 0 : index
    %c0_0 = arith.constant 0 : index
    %0 = vector.load %arg1[%c0, %c0_0] : memref<4x1024xf32, #tpu.memory_space<vmem>>, vector<4x1024xf32>
    %c0_1 = arith.constant 0 : index
    %c0_2 = arith.constant 0 : index
    %1 = vector.load %arg2[%c0_1, %c0_2] : memref<4x1024xf32, #tpu.memory_space<vmem>>, vector<4x1024xf32>
    %2 = arith.mulf %0, %1 : vector<4x1024xf32>
    %cst = arith.constant dense<0.000000e+00> : vector<4xf32>
    %3 = vector.multi_reduction <add>, %2, %cst [1] : vector<4x1024xf32> to vector<4xf32>
    %4 = vector.shape_cast %3 : vector<4xf32> to vector<4x1xf32>
    %cst_3 = arith.constant dense<0.000000e+00> : vector<1xf32>
    %5 = vector.multi_reduction <add>, %4, %cst_3 [0] : vector<4x1xf32> to vector<1xf32>
    %6 = vector.shape_cast %5 : vector<1xf32> to vector<1x1xf32>
    %7 = vector.shape_cast %6 : vector<1x1xf32> to vector<1x1x1xf32>
    %8 = vector.shape_cast %7 : vector<1x1x1xf32> to vector<1x1x1xf32>
    %9 = vector.broadcast %8 : vector<1x1x1xf32> to vector<1x8x128xf32>
    %c0_4 = arith.constant 0 : index
    %c0_5 = arith.constant 0 : index
    %c0_6 = arith.constant 0 : index
    %10 = vector.load %arg3[%c0_4, %c0_5, %c0_6] : memref<1x8x128xf32, #tpu.memory_space<vmem>>, vector<1x8x128xf32>
    tpu.vector_store %arg3[%c0_4, %c0_5, %c0_6], %9 {strides = array<i32>} : memref<1x8x128xf32, #tpu.memory_space<vmem>>, vector<1x8x128xf32>,
    return
  }
  func.func @transform_0(%arg0: i32) -> (i32, i32) {
    %c0_i32 = arith.constant 0 : i32
    %c0_i32_0 = arith.constant 0 : i32
    return %arg0, %c0_i32 : i32, i32
  }
  func.func @transform_1(%arg0: i32) -> (i32, i32) {
    %c0_i32 = arith.constant 0 : i32
    %c0_i32_0 = arith.constant 0 : i32
    return %arg0, %c0_i32 : i32, i32
  }
  func.func @transform_2(%arg0: i32) -> (i32, i32, i32) {
    %c0_i32 = arith.constant 0 : i32
    %c0_i32_0 = arith.constant 0 : i32
    %c0_i32_1 = arith.constant 0 : i32
    return %arg0, %c0_i32, %c0_i32_0 : i32, i32, i32
  }
}

</mosaic_0001>

<llo_original>
// kernel: tpu_custom_call.1
$region0: #{tpu_custom_call.1}
  #allocation0 [shape = 'u32[]', space=smem, size = 0x4, offset = 0x4, fixed_abs, tag = 'smem constant byte address 0x4 - core index']
  #allocation1 [shape = 'u32[72,128]{1,0:T(1,128)}', space=vmem, size = 0x9000, scoped, tag = 'internal scratch']
  %s0 = inlined_call_operand.hbm [shape: f32[4,1024], index: 0, kind: input, shape index: {}]
  %s1 = inlined_call_operand.hbm [shape: f32[4,1024], index: 1, kind: input, shape index: {}]
  %s2 = inlined_call_operand.hbm [shape: f32[1,8,128], index: 2, kind: output, shape index: {}]
  %s3 = sld [smem:[#allocation0]]
  $region26: #{tpu_custom_call.1} parent=0
    _
  %s5 = ssub.s32 1, %s3
  %s6 = scalar_select 0, %s5, %s3
  $region1: #{tpu_custom_call.1} parent=0
    #allocation2 [shape = 'u8[16384]{0}', space=vmem, size = 0x4000, scoped, tag = 'input window, operand 0, single buffered']
    #allocation3 [shape = 's32[1]{0}', space=sflag, size = 0x4, scoped, tag = 'scoped memory for tpu_custom_call.1']
    #allocation4 [shape = 's32[1]{0}', space=sflag, size = 0x4, scoped, tag = 'scoped memory for tpu_custom_call.1']
    #allocation5 [shape = 'u8[16384]{0}', space=vmem, size = 0x4000, scoped, tag = 'input window, operand 1, single buffered']
    #allocation6 [shape = 's32[1]{0}', space=sflag, size = 0x4, scoped, tag = 'scoped memory for tpu_custom_call.1']
    #allocation7 [shape = 'u8[4096]{0}', space=vmem, size = 0x1000, scoped, tag = 'output window, operand 0, single buffered']
    %7 = vsyncpa [#allocation3], 0
    %8 = vsyncpa [#allocation6], 0
    %9 = vsyncpa [#allocation4], 0
    // Predicated region
    $region2: #{tpu_custom_call.1} parent=1 // pred_check
      _
    $region3: #{tpu_custom_call.1} parent=1 // pred_check_branch
      %11 = sbr.rel (0) target = $region5
    $region4: #{tpu_custom_call.1} parent=1 // pred_region
      %13 = vsyncadd [#allocation3], 0
      %s15 = sshll.u32 %s0, 4
      %s16 = int_to_ptr.hbm [resolvable:$true] %s15
      %s17 = sshll.u32 [#allocation2], 4
      %s18 = int_to_ptr.vmem [resolvable:$true] %s17
      %20 = dma.hbm_to_vmem [thread:$0]  %s16, 512, %s18, [#allocation3]
    $region5: #{tpu_custom_call.1} parent=1 // pred_fallthru
      _
    // Predicated region
    $region6: #{tpu_custom_call.1} parent=1 // pred_check
      _
    $region7: #{tpu_custom_call.1} parent=1 // pred_check_branch
      %22 = sbr.rel (0) target = $region9
    $region8: #{tpu_custom_call.1} parent=1 // pred_region
      %24 = vsyncadd [#allocation6], 0
      %s26 = sshll.u32 %s1, 4
      %s27 = int_to_ptr.hbm [resolvable:$true] %s26
      %s28 = sshll.u32 [#allocation5], 4
      %s29 = int_to_ptr.vmem [resolvable:$true] %s28
      %31 = dma.hbm_to_vmem [thread:$0]  %s27, 512, %s29, [#allocation6]
    $region9: #{tpu_custom_call.1} parent=1 // pred_fallthru
      _
    // Predicated region
    $region10: #{tpu_custom_call.1} parent=1 // pred_check
      _
    $region11: #{tpu_custom_call.1} parent=1 // pred_check_branch
      %33 = sbr.rel (0) target = $region13
    $region12: #{tpu_custom_call.1} parent=1 // pred_region
      %35 = dma.done [#allocation3], 512
    $region13: #{tpu_custom_call.1} parent=1 // pred_fallthru
      _
    // Predicated region
    $region14: #{tpu_custom_call.1} parent=1 // pred_check
      _
    $region15: #{tpu_custom_call.1} parent=1 // pred_check_branch
      %37 = sbr.rel (0) target = $region17
    $region16: #{tpu_custom_call.1} parent=1 // pred_region
      %39 = dma.done [#allocation6], 512
    $region17: #{tpu_custom_call.1} parent=1 // pred_fallthru
      _
    %v40 = vld [vmem:[#allocation2] sm:$0xff]
    %v41 = vld [vmem:[#allocation2 + $0x8] sm:$0xff]
    %v42 = vld [vmem:[#allocation2 + $0x10] sm:$0xff]
    %v43 = vld [vmem:[#allocation2 + $0x18] sm:$0xff]
    %v44 = vld [vmem:[#allocation5] sm:$0xff]
    %v45 = vld [vmem:[#allocation5 + $0x8] sm:$0xff]
    %v46 = vld [vmem:[#allocation5 + $0x10] sm:$0xff]
    %v47 = vld [vmem:[#allocation5 + $0x18] sm:$0xff]
    %v48 = vmul.f32 %v40, %v44
    %v49 = vmul.f32 %v41, %v45
    %v50 = vmul.f32 %v42, %v46
    %v51 = vmul.f32 %v43, %v47
    %56 = vst [vmem:[#allocation1] ss:$2 sm:$0xff] %v48
    %s57 = scalar_lea.vmem [#allocation1], 16
    %58 = vst [vmem:[%s57] ss:$2 sm:$0xff] %v49
    %s59 = scalar_lea.vmem [#allocation1], 32
    %60 = vst [vmem:[%s59] ss:$2 sm:$0xff] %v50
    %s61 = scalar_lea.vmem [#allocation1], 48
    %62 = vst [vmem:[%s61] ss:$2 sm:$0xff] %v51
    %v63 = vld.sshfl [vmem:[#allocation1] sm:$0xff pattern:$0x75316420]
    %v64 = vld.sshfl [vmem:[#allocation1 + $0x8] sm:$0xff pattern:$0x75316420]
    %v65 = vld.sshfl [vmem:[#allocation1 + $0x10] sm:$0xff pattern:$0x75316420]
    %v66 = vld.sshfl [vmem:[#allocation1 + $0x18] sm:$0xff pattern:$0x75316420]
    %v67 = vld.sshfl [vmem:[#allocation1 + $0x20] sm:$0xff pattern:$0x75316420]
    %v68 = vld.sshfl [vmem:[#allocation1 + $0x28] sm:$0xff pattern:$0x75316420]
    %v69 = vld.sshfl [vmem:[#allocation1 + $0x30] sm:$0xff pattern:$0x75316420]
    %v70 = vld.sshfl [vmem:[#allocation1 + $0x38] sm:$0xff pattern:$0x75316420]
    %vm79 = vcmask 1043456
    %v80 = vsel %vm79, %v63, 0.0
    %v81 = vsel %vm79, %v64, 0.0
    %v82 = vadd.f32 %v80, %v81
    %v83 = vsel %vm79, %v65, 0.0
    %v84 = vadd.f32 %v82, %v83
    %v85 = vsel %vm79, %v66, 0.0
    %v86 = vadd.f32 %v84, %v85
    %v87 = vsel %vm79, %v67, 0.0
    %v88 = vadd.f32 %v86, %v87
    %v89 = vsel %vm79, %v68, 0.0
    %v90 = vadd.f32 %v88, %v89
    %v91 = vsel %vm79, %v69, 0.0
    %v92 = vadd.f32 %v90, %v91
    %v93 = vsel %vm79, %v70, 0.0
    %v94 = vadd.f32 %v92, %v93
    %95 = vadd.xlane.f32.xlu0 %v94
    %v96 = vpop.xlane.xlu0 %95
    %v97 = vsel %vm79, %v96, 0.0
    %v98 = vrot.slane %v97, 4
    %v99 = vadd.f32 %v97, %v98
    %v100 = vrot.slane %v99, 2
    %v101 = vadd.f32 %v99, %v100
    %v102 = vrot.slane %v101, 1
    %v103 = vadd.f32 %v101, %v102
    %104 = vst [vmem:[#allocation7] sm:$0xff] %v103
    // Predicated region
    $region18: #{tpu_custom_call.1} parent=1 // pred_check
      _
    $region19: #{tpu_custom_call.1} parent=1 // pred_check_branch
      %106 = sbr.rel (0) target = $region21
    $region20: #{tpu_custom_call.1} parent=1 // pred_region
      %108 = vsyncadd [#allocation4], 0
      %s110 = sshll.u32 [#allocation7], 4
      %s111 = int_to_ptr.vmem [resolvable:$true] %s110
      %s112 = sshll.u32 %s2, 4
      %s113 = int_to_ptr.hbm [resolvable:$true] %s112
      %115 = dma.vmem_to_hbm [thread:$0]  %s111, 128, %s113, [#allocation4]
    $region21: #{tpu_custom_call.1} parent=1 // pred_fallthru
      _
    // Predicated region
    $region22: #{tpu_custom_call.1} parent=1 // pred_check
      _
    $region23: #{tpu_custom_call.1} parent=1 // pred_check_branch
      %117 = sbr.rel (0) target = $region25
    $region24: #{tpu_custom_call.1} parent=1 // pred_region
      %119 = dma.done [#allocation4], 128
    $region25: #{tpu_custom_call.1} parent=1 // pred_fallthru
      _
    %120 = vsyncpa [#allocation3], 1
    %121 = vsyncpa [#allocation6], 1
    %122 = vsyncpa [#allocation4], 1

</llo_original>
